<compile_context>
chip_gen: v5e
topology: v5e:2x2
jax: 0.10.0
libtpu: 0.0.40
codegen_flags: <defaults>
</compile_context>

<pallas_src>
import jax
import jax.numpy as jnp
from jax.experimental import pallas as pl
from jax.experimental.pallas import tpu as pltpu

# Hyperparameters implied by the module's globals (chosen small, TPU-friendly).
STATE_SIZE = 16
ACTION_SIZE = 16
INPUT_SIZE = STATE_SIZE + ACTION_SIZE   # input_size
LAYER1 = 64                             # layer1
LAYER2 = 32                             # layer2
OUTPUT_SIZE = 8                         # output_size
OUT_PAD = 128                           # lane-dense padded output width

TILE_B = 128                            # batch rows per grid step
BATCH = 256                             # demo batch (2 grid steps)

LEAKY_SLOPE = 0.01  # F.leaky_relu default negative_slope


def dqn_kernel(s_ref, a_ref, w1s_ref, w1a_ref, b1_ref,
               w2_ref, b2_ref, w3_ref, b3_ref, o_ref):
    # Layer 1: Linear on the (implicit) concat(states, actions) + ReLU.
    # concat is fused as two matmuls accumulating into the same activation.
    h1 = jnp.dot(s_ref[...], w1s_ref[...], preferred_element_type=jnp.float32)
    h1 = h1 + jnp.dot(a_ref[...], w1a_ref[...], preferred_element_type=jnp.float32)
    h1 = jnp.maximum(h1 + b1_ref[...], 0.0)

    # Layer 2: Linear + LeakyReLU (mul + max, no compare/select).
    h2 = jnp.dot(h1, w2_ref[...], preferred_element_type=jnp.float32) + b2_ref[...]
    h2 = jnp.maximum(h2, LEAKY_SLOPE * h2)

    # Output layer: Linear (padded to 128 lanes -> full-width store).
    out = jnp.dot(h2, w3_ref[...], preferred_element_type=jnp.float32) + b3_ref[...]
    o_ref[...] = out.astype(o_ref.dtype)


def dqn_call(states, actions, params):
    """Mirrors DQN.__call__: forward on concat(states, actions) (concat fused in-kernel).

    states:  (B, STATE_SIZE)  float32
    actions: (B, ACTION_SIZE) float32
    returns  (B, OUTPUT_SIZE) float32
    """
    w1s, w1a, b1, w2, b2, w3p, b3p = params
    B = states.shape[0]

    # Pad batch up to a multiple of TILE_B (zero rows are harmless, sliced away).
    n_blocks = pl.cdiv(B, TILE_B)
    Bp = n_blocks * TILE_B
    if Bp != B:
        pad = Bp - B
        states = jnp.pad(states, ((0, pad), (0, 0)))
        actions = jnp.pad(actions, ((0, pad), (0, 0)))

    # Weights/biases: constant index maps -> DMA'd once, VMEM-resident across steps.
    const = lambda i: (0, 0)
    row_blk = lambda i: (i, 0)

    out = pl.pallas_call(
        dqn_kernel,
        out_shape=jax.ShapeDtypeStruct((Bp, OUT_PAD), jnp.float32),
        grid=(n_blocks,),
        in_specs=[
            pl.BlockSpec((TILE_B, STATE_SIZE), row_blk),    # states block
            pl.BlockSpec((TILE_B, ACTION_SIZE), row_blk),   # actions block
            pl.BlockSpec((STATE_SIZE, LAYER1), const),      # W1 (states half)
            pl.BlockSpec((ACTION_SIZE, LAYER1), const),     # W1 (actions half)
            pl.BlockSpec((1, LAYER1), const),               # b1
            pl.BlockSpec((LAYER1, LAYER2), const),          # W2
            pl.BlockSpec((1, LAYER2), const),               # b2
            pl.BlockSpec((LAYER2, OUT_PAD), const),         # W3 (lane-padded)
            pl.BlockSpec((1, OUT_PAD), const),              # b3 (lane-padded)
        ],
        out_specs=pl.BlockSpec((TILE_B, OUT_PAD), row_blk),
        compiler_params=pltpu.CompilerParams(
            dimension_semantics=("parallel",)),
    )(states, actions, w1s, w1a, b1, w2, b2, w3p, b3p)

    # Single slice back to the logical (B, OUTPUT_SIZE) result.
    return out[:B, :OUTPUT_SIZE]


def init_params(key):
    """Deterministic init matching nn.Linear shapes (stored pre-transposed).

    Returns (w1s, w1a, b1, w2, b2, w3_padded, b3_padded).
    """
    k1, k2, k3, k4, k5, k6 = jax.random.split(key, 6)

    def linear_init(kw, kb, fan_in, fan_out):
        # Uniform(-1/sqrt(fan_in), 1/sqrt(fan_in)) like PyTorch default.
        bound = 1.0 / jnp.sqrt(fan_in)
        w = jax.random.uniform(kw, (fan_in, fan_out), jnp.float32, -bound, bound)
        b = jax.random.uniform(kb, (1, fan_out), jnp.float32, -bound, bound)
        return w, b

    w1, b1 = linear_init(k1, k2, INPUT_SIZE, LAYER1)
    w2, b2 = linear_init(k3, k4, LAYER1, LAYER2)
    w3, b3 = linear_init(k5, k6, LAYER2, OUTPUT_SIZE)

    # Split W1 along its input axis to fuse the concat into the kernel.
    w1s = w1[:STATE_SIZE, :]
    w1a = w1[STATE_SIZE:, :]

    # Zero-pad the output layer to 128 lanes (lane-dense store; extra cols unused).
    w3p = jnp.zeros((LAYER2, OUT_PAD), jnp.float32).at[:, :OUTPUT_SIZE].set(w3)
    b3p = jnp.zeros((1, OUT_PAD), jnp.float32).at[:, :OUTPUT_SIZE].set(b3)

    return (w1s, w1a, b1, w2, b2, w3p, b3p), (w1, b1, w2, b2, w3, b3)


def reference_forward(states, actions, ref_params):
    """Plain-JAX reference (concat + 3 Linears) for validation."""
    w1, b1, w2, b2, w3, b3 = ref_params
    x = jnp.concatenate([states, actions], axis=1)
    h1 = jnp.maximum(x @ w1 + b1, 0.0)
    z2 = h1 @ w2 + b2
    h2 = jnp.where(z2 >= 0.0, z2, LEAKY_SLOPE * z2)
    return h2 @ w3 + b3


if __name__ == "__main__":
    key = jax.random.PRNGKey(0)
    kp, ks, ka = jax.random.split(key, 3)

    params, ref_params = init_params(kp)
    states = jax.random.normal(ks, (BATCH, STATE_SIZE), jnp.float32)
    actions = jax.random.normal(ka, (BATCH, ACTION_SIZE), jnp.float32)

    out = dqn_call(states, actions, params)
    out = jax.block_until_ready(out)

    ref = reference_forward(states, actions, ref_params)
    assert out.shape == (BATCH, OUTPUT_SIZE)
    assert jnp.allclose(out, ref, atol=1e-4, rtol=1e-4)

    # TODO(synk): loss()/save_params()/load_params()/copy() are training/IO utilities,
    # not part of the forward pass, and are intentionally not translated.
    print("KERNEL_OK")
</pallas_src>

<mosaic_0001>
module attributes {stable_mosaic.version = 11 : i64} {
  func.func @dqn_kernel(%arg0: i32, %arg1: memref<128x16xf32, #tpu.memory_space<vmem>>, %arg2: memref<128x16xf32, #tpu.memory_space<vmem>>, %arg3: memref<16x64xf32, #tpu.memory_space<vmem>>, %arg4: memref<16x64xf32, #tpu.memory_space<vmem>>, %arg5: memref<1x64xf32, #tpu.memory_space<vmem>>, %arg6: memref<64x32xf32, #tpu.memory_space<vmem>>, %arg7: memref<1x32xf32, #tpu.memory_space<vmem>>, %arg8: memref<32x128xf32, #tpu.memory_space<vmem>>, %arg9: memref<1x128xf32, #tpu.memory_space<vmem>>, %arg10: memref<128x128xf32, #tpu.memory_space<vmem>>) attributes {dimension_semantics = [#tpu.dimension_semantics<parallel>], iteration_bounds = array<i64: 2>, scalar_prefetch = 0 : i64, scratch_operands = 0 : i64, tpu.core_type = #tpu.core_type<tc>, window_params = [{transform_indices = @transform_0, window_bounds = array<i64: 128, 16>}, {transform_indices = @transform_1, window_bounds = array<i64: 128, 16>}, {pipeline_mode = #tpu.pipeline_mode<synchronous>, transform_indices = @transform_2, window_bounds = array<i64: 16, 64>}, {pipeline_mode = #tpu.pipeline_mode<synchronous>, transform_indices = @transform_3, window_bounds = array<i64: 16, 64>}, {pipeline_mode = #tpu.pipeline_mode<synchronous>, transform_indices = @transform_4, window_bounds = array<i64: 1, 64>}, {pipeline_mode = #tpu.pipeline_mode<synchronous>, transform_indices = @transform_5, window_bounds = array<i64: 64, 32>}, {pipeline_mode = #tpu.pipeline_mode<synchronous>, transform_indices = @transform_6, window_bounds = array<i64: 1, 32>}, {pipeline_mode = #tpu.pipeline_mode<synchronous>, transform_indices = @transform_7, window_bounds = array<i64: 32, 128>}, {pipeline_mode = #tpu.pipeline_mode<synchronous>, transform_indices = @transform_8, window_bounds = array<i64: 1, 128>}, {transform_indices = @transform_9, window_bounds = array<i64: 128, 128>}]} {
    %c0 = arith.constant 0 : index
    %c0_0 = arith.constant 0 : index
    %0 = vector.load %arg1[%c0, %c0_0] : memref<128x16xf32, #tpu.memory_space<vmem>>, vector<128x16xf32>
    %c0_1 = arith.constant 0 : index
    %c0_2 = arith.constant 0 : index
    %1 = vector.load %arg3[%c0_1, %c0_2] : memref<16x64xf32, #tpu.memory_space<vmem>>, vector<16x64xf32>
    %cst = arith.constant dense<0.000000e+00> : vector<128x64xf32>
    %2 = tpu.matmul %0, %1, %cst {dimension_numbers = #tpu.dot_dimension_numbers<[1], [0], [0], [1], [0, 0, 1, 1], [], []>} : vector<128x16xf32>, vector<16x64xf32>, vector<128x64xf32> -> vector<128x64xf32>
    %c0_3 = arith.constant 0 : index
    %c0_4 = arith.constant 0 : index
    %3 = vector.load %arg2[%c0_3, %c0_4] : memref<128x16xf32, #tpu.memory_space<vmem>>, vector<128x16xf32>
    %c0_5 = arith.constant 0 : index
    %c0_6 = arith.constant 0 : index
    %4 = vector.load %arg4[%c0_5, %c0_6] : memref<16x64xf32, #tpu.memory_space<vmem>>, vector<16x64xf32>
    %cst_7 = arith.constant dense<0.000000e+00> : vector<128x64xf32>
    %5 = tpu.matmul %3, %4, %cst_7 {dimension_numbers = #tpu.dot_dimension_numbers<[1], [0], [0], [1], [0, 0, 1, 1], [], []>} : vector<128x16xf32>, vector<16x64xf32>, vector<128x64xf32> -> vector<128x64xf32>
    %6 = arith.addf %2, %5 : vector<128x64xf32>
    %c0_8 = arith.constant 0 : index
    %c0_9 = arith.constant 0 : index
    %7 = vector.load %arg5[%c0_8, %c0_9] : memref<1x64xf32, #tpu.memory_space<vmem>>, vector<1x64xf32>
    %8 = vector.broadcast %7 : vector<1x64xf32> to vector<128x64xf32>
    %9 = arith.addf %6, %8 : vector<128x64xf32>
    %cst_10 = arith.constant 0.000000e+00 : f32
    %10 = vector.broadcast %cst_10 : f32 to vector<128x64xf32>
    %11 = arith.maximumf %9, %10 : vector<128x64xf32>
    %c0_11 = arith.constant 0 : index
    %c0_12 = arith.constant 0 : index
    %12 = vector.load %arg6[%c0_11, %c0_12] : memref<64x32xf32, #tpu.memory_space<vmem>>, vector<64x32xf32>
    %cst_13 = arith.constant dense<0.000000e+00> : vector<128x32xf32>
    %13 = tpu.matmul %11, %12, %cst_13 {dimension_numbers = #tpu.dot_dimension_numbers<[1], [0], [0], [1], [0, 0, 1, 1], [], []>} : vector<128x64xf32>, vector<64x32xf32>, vector<128x32xf32> -> vector<128x32xf32>
    %c0_14 = arith.constant 0 : index
    %c0_15 = arith.constant 0 : index
    %14 = vector.load %arg7[%c0_14, %c0_15] : memref<1x32xf32, #tpu.memory_space<vmem>>, vector<1x32xf32>
    %15 = vector.broadcast %14 : vector<1x32xf32> to vector<128x32xf32>
    %16 = arith.addf %13, %15 : vector<128x32xf32>
    %cst_16 = arith.constant 0.00999999977 : f32
    %17 = vector.broadcast %cst_16 : f32 to vector<128x32xf32>
    %18 = arith.mulf %17, %16 : vector<128x32xf32>
    %19 = arith.maximumf %16, %18 : vector<128x32xf32>
    %c0_17 = arith.constant 0 : index
    %c0_18 = arith.constant 0 : index
    %20 = vector.load %arg8[%c0_17, %c0_18] : memref<32x128xf32, #tpu.memory_space<vmem>>, vector<32x128xf32>
    %cst_19 = arith.constant dense<0.000000e+00> : vector<128x128xf32>
    %21 = tpu.matmul %19, %20, %cst_19 {dimension_numbers = #tpu.dot_dimension_numbers<[1], [0], [0], [1], [0, 0, 1, 1], [], []>} : vector<128x32xf32>, vector<32x128xf32>, vector<128x128xf32> -> vector<128x128xf32>
    %c0_20 = arith.constant 0 : index
    %c0_21 = arith.constant 0 : index
    %22 = vector.load %arg9[%c0_20, %c0_21] : memref<1x128xf32, #tpu.memory_space<vmem>>, vector<1x128xf32>
    %23 = vector.broadcast %22 : vector<1x128xf32> to vector<128x128xf32>
    %24 = arith.addf %21, %23 : vector<128x128xf32>
    %c0_22 = arith.constant 0 : index
    %c0_23 = arith.constant 0 : index
    %25 = vector.load %arg10[%c0_22, %c0_23] : memref<128x128xf32, #tpu.memory_space<vmem>>, vector<128x128xf32>
    tpu.vector_store %arg10[%c0_22, %c0_23], %24 {strides = array<i32>} : memref<128x128xf32, #tpu.memory_space<vmem>>, vector<128x128xf32>,
    return
  }
  func.func @transform_0(%arg0: i32) -> (i32, i32) {
    %c0_i32 = arith.constant 0 : i32
    %c0_i32_0 = arith.constant 0 : i32
    return %arg0, %c0_i32 : i32, i32
  }
  func.func @transform_1(%arg0: i32) -> (i32, i32) {
    %c0_i32 = arith.constant 0 : i32
    %c0_i32_0 = arith.constant 0 : i32
    return %arg0, %c0_i32 : i32, i32
  }
  func.func @transform_2(%arg0: i32) -> (i32, i32) {
    %c0_i32 = arith.constant 0 : i32
    %c0_i32_0 = arith.constant 0 : i32
    %c0_i32_1 = arith.constant 0 : i32
    return %c0_i32, %c0_i32_0 : i32, i32
  }
  func.func @transform_3(%arg0: i32) -> (i32, i32) {
    %c0_i32 = arith.constant 0 : i32
    %c0_i32_0 = arith.constant 0 : i32
    %c0_i32_1 = arith.constant 0 : i32
    return %c0_i32, %c0_i32_0 : i32, i32
  }
  func.func @transform_4(%arg0: i32) -> (i32, i32) {
    %c0_i32 = arith.constant 0 : i32
    %c0_i32_0 = arith.constant 0 : i32
    %c0_i32_1 = arith.constant 0 : i32
    return %c0_i32, %c0_i32_0 : i32, i32
  }
  func.func @transform_5(%arg0: i32) -> (i32, i32) {
    %c0_i32 = arith.constant 0 : i32
    %c0_i32_0 = arith.constant 0 : i32
    %c0_i32_1 = arith.constant 0 : i32
    return %c0_i32, %c0_i32_0 : i32, i32
  }
  func.func @transform_6(%arg0: i32) -> (i32, i32) {
    %c0_i32 = arith.constant 0 : i32
    %c0_i32_0 = arith.constant 0 : i32
    %c0_i32_1 = arith.constant 0 : i32
    return %c0_i32, %c0_i32_0 : i32, i32
  }
  func.func @transform_7(%arg0: i32) -> (i32, i32) {
    %c0_i32 = arith.constant 0 : i32
    %c0_i32_0 = arith.constant 0 : i32
    %c0_i32_1 = arith.constant 0 : i32
    return %c0_i32, %c0_i32_0 : i32, i32
  }
  func.func @transform_8(%arg0: i32) -> (i32, i32) {
    %c0_i32 = arith.constant 0 : i32
    %c0_i32_0 = arith.constant 0 : i32
    %c0_i32_1 = arith.constant 0 : i32
    return %c0_i32, %c0_i32_0 : i32, i32
  }
  func.func @transform_9(%arg0: i32) -> (i32, i32) {
    %c0_i32 = arith.constant 0 : i32
    %c0_i32_0 = arith.constant 0 : i32
    return %arg0, %c0_i32 : i32, i32
  }
}

</mosaic_0001>

<llo_original>
// kernel: tpu_custom_call.1
$region0: #{tpu_custom_call.1}
  #allocation0 [shape = 'u32[]', space=smem, size = 0x4, offset = 0x4, fixed_abs, tag = 'smem constant byte address 0x4 - core index']
  #allocation1 [shape = 'u32[72,128]{1,0:T(1,128)}', space=vmem, size = 0x9000, scoped, tag = 'internal scratch']
  %s0 = inlined_call_operand.vmem [shape: f32[256,16], index: 0, kind: input, shape index: {}]
  %s1 = inlined_call_operand.vmem [shape: f32[256,16], index: 1, kind: input, shape index: {}]
  %s2 = inlined_call_operand.vmem [shape: f32[16,64], index: 2, kind: input, shape index: {}]
  %s3 = inlined_call_operand.vmem [shape: f32[16,64], index: 3, kind: input, shape index: {}]
  %s4 = inlined_call_operand.vmem [shape: f32[1,64], index: 4, kind: input, shape index: {}]
  %s5 = inlined_call_operand.vmem [shape: f32[64,32], index: 5, kind: input, shape index: {}]
  %s6 = inlined_call_operand.vmem [shape: f32[1,32], index: 6, kind: input, shape index: {}]
  %s7 = inlined_call_operand.vmem [shape: f32[32,128], index: 7, kind: input, shape index: {}]
  %s8 = inlined_call_operand.vmem [shape: f32[1,128], index: 8, kind: input, shape index: {}]
  %s9 = inlined_call_operand.hbm [shape: f32[256,128], index: 9, kind: output, shape index: {}]
  %s10 = sld [smem:[#allocation0]]
  $region69: #{tpu_custom_call.1} parent=0
    _
  %s12 = ssub.s32 1, %s10
  %s13 = scalar_select 0, %s12, %s10
  $region1: #{tpu_custom_call.1} parent=0
    #allocation2 [shape = 'u8[131072]{0}', space=vmem, size = 0x20000, scoped, tag = 'output window, operand 0']
    #allocation3 [shape = 's32[2]{0}', space=sflag, size = 0x8, scoped, tag = 'scoped memory for tpu_custom_call.1']
    %14 = vsyncpa [#allocation3], 0
    %s15 = scalar_lea.sflag [#allocation3], 1
    %16 = vsyncpa %s15, 0
    loop: start=0, step=1, limit=4
    $region2: #{tpu_custom_call.1} parent=1 // loop_pre_header
      _
    $region3: #{tpu_custom_call.1} parent=1 // loop_header
      %s18 = sphi 0, %s22
      %p19 = scmp.ge.s32.totalorder %s18, 4
      %s28 = sphi 0, %s30
      %s31 = sphi 0, %s28
      %s32 = sphi 0, %s31
      %s48 = sphi 0, %s32
      %s54 = sphi 0, %s56
      %s57 = sphi 0, %s54
      %s58 = sphi 0, %s57
      %s74 = sphi 0, %s58
      %s78 = sphi 0, %s78
      %s80 = sphi 0, %s78
      %s81 = sphi 0, %s80
      %s95 = sphi 0, %s81
      %s99 = sphi 0, %s99
      %s101 = sphi 0, %s99
      %s102 = sphi 0, %s101
      %s116 = sphi 0, %s102
      %s120 = sphi 0, %s120
      %s122 = sphi 0, %s120
      %s123 = sphi 0, %s122
      %s137 = sphi 0, %s123
      %s141 = sphi 0, %s141
      %s143 = sphi 0, %s141
      %s144 = sphi 0, %s143
      %s158 = sphi 0, %s144
      %s162 = sphi 0, %s162
      %s164 = sphi 0, %s162
      %s165 = sphi 0, %s164
      %s179 = sphi 0, %s165
      %s183 = sphi 0, %s183
      %s185 = sphi 0, %s183
      %s186 = sphi 0, %s185
      %s200 = sphi 0, %s186
      %s204 = sphi 0, %s204
      %s206 = sphi 0, %s204
      %s207 = sphi 0, %s206
      %s221 = sphi 0, %s207
      %s227 = sphi 0, %s229
      %s230 = sphi 0, %s227
      %s231 = sphi 0, %s230
      %s247 = sphi 0, %s231
    $region4: #{tpu_custom_call.1} parent=1 // loop_header_branch
      %21 = sbr.rel (%p19) target = $region8
    $region5: #{tpu_custom_call.1} parent=1 // loop_body
      %s23 = ssub.s32 %s18, 1
      %s24 = ssub.s32 %s18, 2
      %s25 = sadd.s32 %s18, 1
      %s26 = ssub.s32 %s18, %s25
      %p27 = scmp.eq.s32.totalorder %s26, 0
      %s29 = sadd.s32 %s28, 1
      %s30 = scalar_select %p27, %s28, %s29
      %p33 = pneg %p27
      %p34 = scmp.eq.s32.totalorder %s18, 1
      %p35 = por %p33, %p34
      %p36 = scmp.ne.s32.totalorder %s28, %s31
      %p37 = scmp.eq.s32.totalorder %s18, 0
      %p38 = por %p36, %p37
      %p39 = scmp.ne.s32.totalorder %s28, %s31
      %p40 = scmp.eq.s32.totalorder %s23, 1
      %p41 = por %p39, %p40
      %p42 = scmp.ne.s32.totalorder %s31, %s32
      %p43 = scmp.eq.s32.totalorder %s23, 0
      %p44 = por %p42, %p43
      %p45 = scmp.ne.s32.totalorder %s31, %s32
      %p46 = scmp.eq.s32.totalorder %s24, 1
      %p47 = por %p45, %p46
      %p49 = scmp.ne.s32.totalorder %s32, %s48
      %p50 = scmp.eq.s32.totalorder %s24, 0
      %p51 = por %p49, %p50
      %s52 = ssub.s32 %s18, %s25
      %p53 = scmp.eq.s32.totalorder %s52, 0
      %s55 = sadd.s32 %s54, 1
      %s56 = scalar_select %p53, %s54, %s55
      %p59 = pneg %p53
      %p60 = scmp.eq.s32.totalorder %s18, 1
      %p61 = por %p59, %p60
      %p62 = scmp.ne.s32.totalorder %s54, %s57
      %p63 = scmp.eq.s32.totalorder %s18, 0
      %p64 = por %p62, %p63
      %p65 = scmp.ne.s32.totalorder %s54, %s57
      %p66 = scmp.eq.s32.totalorder %s23, 1
      %p67 = por %p65, %p66
      %p68 = scmp.ne.s32.totalorder %s57, %s58
      %p69 = scmp.eq.s32.totalorder %s23, 0
      %p70 = por %p68, %p69
      %p71 = scmp.ne.s32.totalorder %s57, %s58
      %p72 = scmp.eq.s32.totalorder %s24, 1
      %p73 = por %p71, %p72
      %p75 = scmp.ne.s32.totalorder %s58, %s74
      %p76 = scmp.eq.s32.totalorder %s24, 0
      %p77 = por %p75, %p76
      %s79 = sadd.s32 %s78, 1
      %p82 = scmp.eq.s32.totalorder %s18, 1
      %p83 = scmp.ne.s32.totalorder %s78, %s80
      %p84 = scmp.eq.s32.totalorder %s18, 0
      %p85 = por %p83, %p84
      %p86 = scmp.ne.s32.totalorder %s78, %s80
      %p87 = scmp.eq.s32.totalorder %s23, 1
      %p88 = por %p86, %p87
      %p89 = scmp.ne.s32.totalorder %s80, %s81
      %p90 = scmp.eq.s32.totalorder %s23, 0
      %p91 = por %p89, %p90
      %p92 = scmp.ne.s32.totalorder %s80, %s81
      %p93 = scmp.eq.s32.totalorder %s24, 1
      %p94 = por %p92, %p93
      %p96 = scmp.ne.s32.totalorder %s81, %s95
      %p97 = scmp.eq.s32.totalorder %s24, 0
      %p98 = por %p96, %p97
      %s100 = sadd.s32 %s99, 1
      %p103 = scmp.eq.s32.totalorder %s18, 1
      %p104 = scmp.ne.s32.totalorder %s99, %s101
      %p105 = scmp.eq.s32.totalorder %s18, 0
      %p106 = por %p104, %p105
      %p107 = scmp.ne.s32.totalorder %s99, %s101
      %p108 = scmp.eq.s32.totalorder %s23, 1
      %p109 = por %p107, %p108
      %p110 = scmp.ne.s32.totalorder %s101, %s102
      %p111 = scmp.eq.s32.totalorder %s23, 0
      %p112 = por %p110, %p111
      %p113 = scmp.ne.s32.totalorder %s101, %s102
      %p114 = scmp.eq.s32.totalorder %s24, 1
      %p115 = por %p113, %p114
      %p117 = scmp.ne.s32.totalorder %s102, %s116
      %p118 = scmp.eq.s32.totalorder %s24, 0
      %p119 = por %p117, %p118
      %s121 = sadd.s32 %s120, 1
      %p124 = scmp.eq.s32.totalorder %s18, 1
      %p125 = scmp.ne.s32.totalorder %s120, %s122
      %p126 = scmp.eq.s32.totalorder %s18, 0
      %p127 = por %p125, %p126
      %p128 = scmp.ne.s32.totalorder %s120, %s122
      %p129 = scmp.eq.s32.totalorder %s23, 1
      %p130 = por %p128, %p129
      %p131 = scmp.ne.s32.totalorder %s122, %s123
      %p132 = scmp.eq.s32.totalorder %s23, 0
      %p133 = por %p131, %p132
      %p134 = scmp.ne.s32.totalorder %s122, %s123
      %p135 = scmp.eq.s32.totalorder %s24, 1
      %p136 = por %p134, %p135
      %p138 = scmp.ne.s32.totalorder %s123, %s137
      %p139 = scmp.eq.s32.totalorder %s24, 0
      %p140 = por %p138, %p139
      %s142 = sadd.s32 %s141, 1
      %p145 = scmp.eq.s32.totalorder %s18, 1
      %p146 = scmp.ne.s32.totalorder %s141, %s143
      %p147 = scmp.eq.s32.totalorder %s18, 0
      %p148 = por %p146, %p147
      %p149 = scmp.ne.s32.totalorder %s141, %s143
      %p150 = scmp.eq.s32.totalorder %s23, 1
      %p151 = por %p149, %p150
      %p152 = scmp.ne.s32.totalorder %s143, %s144
      %p153 = scmp.eq.s32.totalorder %s23, 0
      %p154 = por %p152, %p153
      %p155 = scmp.ne.s32.totalorder %s143, %s144
      %p156 = scmp.eq.s32.totalorder %s24, 1
      %p157 = por %p155, %p156
      %p159 = scmp.ne.s32.totalorder %s144, %s158
      %p160 = scmp.eq.s32.totalorder %s24, 0
      %p161 = por %p159, %p160
      %s163 = sadd.s32 %s162, 1
      %p166 = scmp.eq.s32.totalorder %s18, 1
      %p167 = scmp.ne.s32.totalorder %s162, %s164
      %p168 = scmp.eq.s32.totalorder %s18, 0
      %p169 = por %p167, %p168
      %p170 = scmp.ne.s32.totalorder %s162, %s164
      %p171 = scmp.eq.s32.totalorder %s23, 1
      %p172 = por %p170, %p171
      %p173 = scmp.ne.s32.totalorder %s164, %s165
      %p174 = scmp.eq.s32.totalorder %s23, 0
      %p175 = por %p173, %p174
      %p176 = scmp.ne.s32.totalorder %s164, %s165
      %p177 = scmp.eq.s32.totalorder %s24, 1
      %p178 = por %p176, %p177
      %p180 = scmp.ne.s32.totalorder %s165, %s179
      %p181 = scmp.eq.s32.totalorder %s24, 0
      %p182 = por %p180, %p181
      %s184 = sadd.s32 %s183, 1
      %p187 = scmp.eq.s32.totalorder %s18, 1
      %p188 = scmp.ne.s32.totalorder %s183, %s185
      %p189 = scmp.eq.s32.totalorder %s18, 0
      %p190 = por %p188, %p189
      %p191 = scmp.ne.s32.totalorder %s183, %s185
      %p192 = scmp.eq.s32.totalorder %s23, 1
      %p193 = por %p191, %p192
      %p194 = scmp.ne.s32.totalorder %s185, %s186
      %p195 = scmp.eq.s32.totalorder %s23, 0
      %p196 = por %p194, %p195
      %p197 = scmp.ne.s32.totalorder %s185, %s186
      %p198 = scmp.eq.s32.totalorder %s24, 1
      %p199 = por %p197, %p198
      %p201 = scmp.ne.s32.totalorder %s186, %s200
      %p202 = scmp.eq.s32.totalorder %s24, 0
      %p203 = por %p201, %p202
      %s205 = sadd.s32 %s204, 1
      %p208 = scmp.eq.s32.totalorder %s18, 1
      %p209 = scmp.ne.s32.totalorder %s204, %s206
      %p210 = scmp.eq.s32.totalorder %s18, 0
      %p211 = por %p209, %p210
      %p212 = scmp.ne.s32.totalorder %s204, %s206
      %p213 = scmp.eq.s32.totalorder %s23, 1
      %p214 = por %p212, %p213
      %p215 = scmp.ne.s32.totalorder %s206, %s207
      %p216 = scmp.eq.s32.totalorder %s23, 0
      %p217 = por %p215, %p216
      %p218 = scmp.ne.s32.totalorder %s206, %s207
      %p219 = scmp.eq.s32.totalorder %s24, 1
      %p220 = por %p218, %p219
      %p222 = scmp.ne.s32.totalorder %s207, %s221
      %p223 = scmp.eq.s32.totalorder %s24, 0
      %p224 = por %p222, %p223
      %s225 = ssub.s32 %s18, %s25
      %p226 = scmp.eq.s32.totalorder %s225, 0
      %s228 = sadd.s32 %s227, 1
      %s229 = scalar_select %p226, %s227, %s228
      %p232 = pneg %p226
      %p233 = scmp.eq.s32.totalorder %s18, 1
      %p234 = por %p232, %p233
      %p235 = scmp.ne.s32.totalorder %s227, %s230
      %p236 = scmp.eq.s32.totalorder %s18, 0
      %p237 = por %p235, %p236
      %p238 = scmp.ne.s32.totalorder %s227, %s230
      %p239 = scmp.eq.s32.totalorder %s23, 1
      %p240 = por %p238, %p239
      %p241 = scmp.ne.s32.totalorder %s230, %s231
      %p242 = scmp.eq.s32.totalorder %s23, 0
      %p243 = por %p241, %p242
      %p244 = scmp.ne.s32.totalorder %s230, %s231
      %p245 = scmp.eq.s32.totalorder %s24, 1
      %p246 = por %p244, %p245
      %p248 = scmp.ne.s32.totalorder %s231, %s247
      %p249 = scmp.eq.s32.totalorder %s24, 0
      %p250 = por %p248, %p249
      %p251 = scmp.le.s32.totalorder 1, %s18
      %p252 = scmp.lt.s32.totalorder %s18, 3
      %p253 = pnand %p251, %p252
      %p254 = pneg %p253
      // Predicated region
      $region9: #{tpu_custom_call.1} parent=5 // pred_check
        _
      $region10: #{tpu_custom_call.1} parent=5 // pred_check_branch
        %256 = sbr.rel (%p253) target = $region12
      $region11: #{tpu_custom_call.1} parent=5 // pred_region
        %s257 = ssub.s32 %s18, 1
        // Predicated region
        $region13: #{tpu_custom_call.1} parent=11 // pred_check
          %p258 = pneg %p91
        $region14: #{tpu_custom_call.1} parent=11 // pred_check_branch
          %260 = sbr.rel (%p258) target = $region16
        $region15: #{tpu_custom_call.1} parent=11 // pred_region
          _
        $region16: #{tpu_custom_call.1} parent=11 // pred_fallthru
          _
        // Predicated region
        $region17: #{tpu_custom_call.1} parent=11 // pred_check
          %p261 = pneg %p112
        $region18: #{tpu_custom_call.1} parent=11 // pred_check_branch
          %263 = sbr.rel (%p261) target = $region20
        $region19: #{tpu_custom_call.1} parent=11 // pred_region
          _
        $region20: #{tpu_custom_call.1} parent=11 // pred_fallthru
          _
        // Predicated region
        $region21: #{tpu_custom_call.1} parent=11 // pred_check
          %p264 = pneg %p133
        $region22: #{tpu_custom_call.1} parent=11 // pred_check_branch
          %266 = sbr.rel (%p264) target = $region24
        $region23: #{tpu_custom_call.1} parent=11 // pred_region
          _
        $region24: #{tpu_custom_call.1} parent=11 // pred_fallthru
          _
        // Predicated region
        $region25: #{tpu_custom_call.1} parent=11 // pred_check
          %p267 = pneg %p154
        $region26: #{tpu_custom_call.1} parent=11 // pred_check_branch
          %269 = sbr.rel (%p267) target = $region28
        $region27: #{tpu_custom_call.1} parent=11 // pred_region
          _
        $region28: #{tpu_custom_call.1} parent=11 // pred_fallthru
          _
        // Predicated region
        $region29: #{tpu_custom_call.1} parent=11 // pred_check
          %p270 = pneg %p175
        $region30: #{tpu_custom_call.1} parent=11 // pred_check_branch
          %272 = sbr.rel (%p270) target = $region32
        $region31: #{tpu_custom_call.1} parent=11 // pred_region
          _
        $region32: #{tpu_custom_call.1} parent=11 // pred_fallthru
          _
        // Predicated region
        $region33: #{tpu_custom_call.1} parent=11 // pred_check
          %p273 = pneg %p196
        $region34: #{tpu_custom_call.1} parent=11 // pred_check_branch
          %275 = sbr.rel (%p273) target = $region36
        $region35: #{tpu_custom_call.1} parent=11 // pred_region
          _
        $region36: #{tpu_custom_call.1} parent=11 // pred_fallthru
          _
        // Predicated region
        $region37: #{tpu_custom_call.1} parent=11 // pred_check
          %p276 = pneg %p217
        $region38: #{tpu_custom_call.1} parent=11 // pred_check_branch
          %278 = sbr.rel (%p276) target = $region40
        $region39: #{tpu_custom_call.1} parent=11 // pred_region
          _
        $region40: #{tpu_custom_call.1} parent=11 // pred_fallthru
          _
      $region12: #{tpu_custom_call.1} parent=5 // pred_fallthru
        _
      %p279 = scmp.lt.s32.totalorder %s18, 2
      // Predicated region
      $region41: #{tpu_custom_call.1} parent=5 // pred_check
        %p280 = pneg %p279
      $region42: #{tpu_custom_call.1} parent=5 // pred_check_branch
        %282 = sbr.rel (%p280) target = $region44
      $region43: #{tpu_custom_call.1} parent=5 // pred_region
        // Predicated region
        $region45: #{tpu_custom_call.1} parent=43 // pred_check
          %p283 = pneg %p38
        $region46: #{tpu_custom_call.1} parent=43 // pred_check_branch
          %285 = sbr.rel (%p283) target = $region48
        $region47: #{tpu_custom_call.1} parent=43 // pred_region
          %s286 = smul.u32 16, %s18
          %p287 = scmp.lt.s32.totalorder %s286, 31
          %s288 = scalar_select %p287, %s286, 31
          %s289 = smul.addr %s288, 8
          %s290 = scalar_lea.vmem %s0, %s289
          %s291 = smul.u32 16, %s18
        $region48: #{tpu_custom_call.1} parent=43 // pred_fallthru
          _
        // Predicated region
        $region49: #{tpu_custom_call.1} parent=43 // pred_check
          %p292 = pneg %p64
        $region50: #{tpu_custom_call.1} parent=43 // pred_check_branch
          %294 = sbr.rel (%p292) target = $region52
        $region51: #{tpu_custom_call.1} parent=43 // pred_region
          %s295 = smul.u32 16, %s18
          %p296 = scmp.lt.s32.totalorder %s295, 31
          %s297 = scalar_select %p296, %s295, 31
          %s298 = smul.addr %s297, 8
          %s299 = scalar_lea.vmem %s1, %s298
          %s300 = smul.u32 16, %s18
        $region52: #{tpu_custom_call.1} parent=43 // pred_fallthru
          _
      $region44: #{tpu_custom_call.1} parent=5 // pred_fallthru
        _
      %p301 = scmp.le.s32.totalorder 1, %s18
      %p302 = scmp.lt.s32.totalorder %s18, 3
      %p303 = pnand %p301, %p302
      %p304 = pneg %p303
      // Predicated region
      $region53: #{tpu_custom_call.1} parent=5 // pred_check
        _
      $region54: #{tpu_custom_call.1} parent=5 // pred_check_branch
        %306 = sbr.rel (%p303) target = $region56
      $region55: #{tpu_custom_call.1} parent=5 // pred_region
        %s307 = ssub.s32 %s18, 1
        %s308 = smul.u32 16, %s23
        %p309 = scmp.lt.s32.totalorder %s308, 31
        %s310 = scalar_select %p309, %s308, 31
        %s311 = smul.addr %s310, 8
        %s312 = scalar_lea.vmem %s0, %s311
        %p313 = pneg %p44
        %p314 = pneg %p41
        %s315 = smul.u32 16, %s23
        %p316 = scmp.lt.s32.totalorder %s315, 31
        %s317 = scalar_select %p316, %s315, 31
        %s318 = smul.addr %s317, 8
        %s319 = scalar_lea.vmem %s1, %s318
        %p320 = pneg %p70
        %p321 = pneg %p67
        %p322 = pneg %p91
        %p323 = pneg %p88
        %p324 = pneg %p112
        %p325 = pneg %p109
        %p326 = pneg %p133
        %p327 = pneg %p130
        %p328 = pneg %p154
        %p329 = pneg %p151
        %p330 = pneg %p175
        %p331 = pneg %p172
        %p332 = pneg %p196
        %p333 = pneg %p193
        %p334 = pneg %p217
        %p335 = pneg %p214
        %p336 = pneg %p243
        %p337 = pneg %p240
        %s338 = sand.u32 %s230, 1
        %s339 = scalar_lea.sflag [#allocation3], %s338
        %s340 = sand.u32 %s230, 1
        %s341 = smul.addr %s340, 128
        %s342 = scalar_lea.vmem [#allocation2], %s341
        %s343 = smul.u32 16, %s23
        %p344 = scmp.lt.s32.totalorder %s343, 31
        %s345 = scalar_select %p344, %s343, 31
        %s346 = smul.addr %s345, 8
        %s347 = scalar_lea.vmem %s0, %s346
        %s348 = smul.u32 16, %s23
        %s349 = smul.u32 16, %s23
        %p350 = scmp.lt.s32.totalorder %s349, 31
        %s351 = scalar_select %p350, %s349, 31
        %s352 = smul.addr %s351, 8
        %s353 = scalar_lea.vmem %s1, %s352
        %s354 = smul.u32 16, %s23
        %s355 = smul.u32 16, %s23
        %v356 = vld [vmem:[%s347] sm:$0xff]
        %v357 = vld [vmem:[%s347 + $0x8] sm:$0xff]
        %v358 = vld [vmem:[%s347 + $0x10] sm:$0xff]
        %v359 = vld [vmem:[%s347 + $0x18] sm:$0xff]
        %v360 = vld [vmem:[%s347 + $0x20] sm:$0xff]
        %v361 = vld [vmem:[%s347 + $0x28] sm:$0xff]
        %v362 = vld [vmem:[%s347 + $0x30] sm:$0xff]
        %v363 = vld [vmem:[%s347 + $0x38] sm:$0xff]
        %v364 = vld [vmem:[%s347 + $0x40] sm:$0xff]
        %v365 = vld [vmem:[%s347 + $0x48] sm:$0xff]
        %v366 = vld [vmem:[%s347 + $0x50] sm:$0xff]
        %v367 = vld [vmem:[%s347 + $0x58] sm:$0xff]
        %v368 = vld [vmem:[%s347 + $0x60] sm:$0xff]
        %v369 = vld [vmem:[%s347 + $0x68] sm:$0xff]
        %v370 = vld [vmem:[%s347 + $0x70] sm:$0xff]
        %v371 = vld [vmem:[%s347 + $0x78] sm:$0xff]
        %v372 = vld [vmem:[%s2] sm:$0xff]
        %v373 = vld [vmem:[%s2 + $0x8] sm:$0xff]
        %v374 = vld [vmem:[%s353] sm:$0xff]
        %v375 = vld [vmem:[%s353 + $0x8] sm:$0xff]
        %v376 = vld [vmem:[%s353 + $0x10] sm:$0xff]
        %v377 = vld [vmem:[%s353 + $0x18] sm:$0xff]
        %v378 = vld [vmem:[%s353 + $0x20] sm:$0xff]
        %v379 = vld [vmem:[%s353 + $0x28] sm:$0xff]
        %v380 = vld [vmem:[%s353 + $0x30] sm:$0xff]
        %v381 = vld [vmem:[%s353 + $0x38] sm:$0xff]
        %v382 = vld [vmem:[%s353 + $0x40] sm:$0xff]
        %v383 = vld [vmem:[%s353 + $0x48] sm:$0xff]
        %v384 = vld [vmem:[%s353 + $0x50] sm:$0xff]
        %v385 = vld [vmem:[%s353 + $0x58] sm:$0xff]
        %v386 = vld [vmem:[%s353 + $0x60] sm:$0xff]
        %v387 = vld [vmem:[%s353 + $0x68] sm:$0xff]
        %v388 = vld [vmem:[%s353 + $0x70] sm:$0xff]
        %v389 = vld [vmem:[%s353 + $0x78] sm:$0xff]
        %v390 = vld [vmem:[%s3] sm:$0xff]
        %v391 = vld [vmem:[%s3 + $0x8] sm:$0xff]
        %vm392 = vcmask 130048
        %v394 = vsel %vm392, %v374, 0
        %v397 = vsel %vm392, %v375, 0
        %v400 = vsel %vm392, %v376, 0
        %v403 = vsel %vm392, %v377, 0
        %v406 = vsel %vm392, %v378, 0
        %v409 = vsel %vm392, %v379, 0
        %v412 = vsel %vm392, %v380, 0
        %v415 = vsel %vm392, %v381, 0
        %v418 = vsel %vm392, %v382, 0
        %v421 = vsel %vm392, %v383, 0
        %v424 = vsel %vm392, %v384, 0
        %v427 = vsel %vm392, %v385, 0
        %v430 = vsel %vm392, %v386, 0
        %v433 = vsel %vm392, %v387, 0
        %v436 = vsel %vm392, %v388, 0
        %v439 = vsel %vm392, %v389, 0
        %441 = vmatpush.msra.mxu0 0.0
        %442 = vmatpush.msra.mxu0 0.0
        %443 = vmatpush.msra.mxu0 0.0
        %444 = vmatpush.msra.mxu0 0.0
        %445 = vmatpush.msra.mxu0 0.0
        %446 = vmatpush.msra.mxu0 0.0
        %447 = vmatpush.msra.mxu0 0.0
        %448 = vmatpush.msra.mxu0 0.0
        %449 = vmatpush.msra.mxu0 0.0
        %450 = vmatpush.msra.mxu0 0.0
        %451 = vmatpush.msra.mxu0 0.0
        %452 = vmatpush.msra.mxu0 0.0
        %453 = vmatpush.msra.mxu0 0.0
        %454 = vmatpush.msra.mxu0 0.0
        %455 = vmatpush.msra.mxu0 %v391
        %456 = vmatpush.msra.mxu0 %v390
        %457 = vmatmul.f32.gmra.mxu0 %v394
        %v458 = vpop.f32.mrf.mxu0
        %v459 = vadd.f32 0.0, %v458
        %460 = vmatmul.f32.gmra.mxu0 %v397
        %v461 = vpop.f32.mrf.mxu0
        %v462 = vadd.f32 0.0, %v461
        %463 = vmatmul.f32.gmra.mxu0 %v400
        %v464 = vpop.f32.mrf.mxu0
        %v465 = vadd.f32 0.0, %v464
        %466 = vmatmul.f32.gmra.mxu0 %v403
        %v467 = vpop.f32.mrf.mxu0
        %v468 = vadd.f32 0.0, %v467
        %469 = vmatmul.f32.gmra.mxu0 %v406
        %v470 = vpop.f32.mrf.mxu0
        %v471 = vadd.f32 0.0, %v470
        %472 = vmatmul.f32.gmra.mxu0 %v409
        %v473 = vpop.f32.mrf.mxu0
        %v474 = vadd.f32 0.0, %v473
        %475 = vmatmul.f32.gmra.mxu0 %v412
        %v476 = vpop.f32.mrf.mxu0
        %v477 = vadd.f32 0.0, %v476
        %478 = vmatmul.f32.gmra.mxu0 %v415
        %v479 = vpop.f32.mrf.mxu0
        %v480 = vadd.f32 0.0, %v479
        %481 = vmatmul.f32.gmra.mxu0 %v418
        %v482 = vpop.f32.mrf.mxu0
        %v483 = vadd.f32 0.0, %v482
        %484 = vmatmul.f32.gmra.mxu0 %v421
        %v485 = vpop.f32.mrf.mxu0
        %v486 = vadd.f32 0.0, %v485
        %487 = vmatmul.f32.gmra.mxu0 %v424
        %v488 = vpop.f32.mrf.mxu0
        %v489 = vadd.f32 0.0, %v488
        %490 = vmatmul.f32.gmra.mxu0 %v427
        %v491 = vpop.f32.mrf.mxu0
        %v492 = vadd.f32 0.0, %v491
        %493 = vmatmul.f32.gmra.mxu0 %v430
        %v494 = vpop.f32.mrf.mxu0
        %v495 = vadd.f32 0.0, %v494
        %496 = vmatmul.f32.gmra.mxu0 %v433
        %v497 = vpop.f32.mrf.mxu0
        %v498 = vadd.f32 0.0, %v497
        %499 = vmatmul.f32.gmra.mxu0 %v436
        %v500 = vpop.f32.mrf.mxu0
        %v501 = vadd.f32 0.0, %v500
        %502 = vmatmul.f32.gmra.mxu0 %v439
        %v503 = vpop.f32.mrf.mxu0
        %v504 = vadd.f32 0.0, %v503
        %505 = vdwg.mxu0
        %v507 = vsel %vm392, %v356, 0
        %v510 = vsel %vm392, %v357, 0
        %v513 = vsel %vm392, %v358, 0
        %v516 = vsel %vm392, %v359, 0
        %v519 = vsel %vm392, %v360, 0
        %v522 = vsel %vm392, %v361, 0
        %v525 = vsel %vm392, %v362, 0
        %v528 = vsel %vm392, %v363, 0
        %v531 = vsel %vm392, %v364, 0
        %v534 = vsel %vm392, %v365, 0
        %v537 = vsel %vm392, %v366, 0
        %v540 = vsel %vm392, %v367, 0
        %v543 = vsel %vm392, %v368, 0
        %v546 = vsel %vm392, %v369, 0
        %v549 = vsel %vm392, %v370, 0
        %v552 = vsel %vm392, %v371, 0
        %554 = vmatpush.msra.mxu0 0.0
        %555 = vmatpush.msra.mxu0 0.0
        %556 = vmatpush.msra.mxu0 0.0
        %557 = vmatpush.msra.mxu0 0.0
        %558 = vmatpush.msra.mxu0 0.0
        %559 = vmatpush.msra.mxu0 0.0
        %560 = vmatpush.msra.mxu0 0.0
        %561 = vmatpush.msra.mxu0 0.0
        %562 = vmatpush.msra.mxu0 0.0
        %563 = vmatpush.msra.mxu0 0.0
        %564 = vmatpush.msra.mxu0 0.0
        %565 = vmatpush.msra.mxu0 0.0
        %566 = vmatpush.msra.mxu0 0.0
        %567 = vmatpush.msra.mxu0 0.0
        %568 = vmatpush.msra.mxu0 %v373
        %569 = vmatpush.msra.mxu0 %v372
        %570 = vmatmul.f32.gmra.mxu0 %v507
        %v571 = vpop.f32.mrf.mxu0
        %v572 = vadd.f32 %v459, %v571
        %573 = vmatmul.f32.gmra.mxu0 %v510
        %v574 = vpop.f32.mrf.mxu0
        %v575 = vadd.f32 %v462, %v574
        %576 = vmatmul.f32.gmra.mxu0 %v513
        %v577 = vpop.f32.mrf.mxu0
        %v578 = vadd.f32 %v465, %v577
        %579 = vmatmul.f32.gmra.mxu0 %v516
        %v580 = vpop.f32.mrf.mxu0
        %v581 = vadd.f32 %v468, %v580
        %582 = vmatmul.f32.gmra.mxu0 %v519
        %v583 = vpop.f32.mrf.mxu0
        %v584 = vadd.f32 %v471, %v583
        %585 = vmatmul.f32.gmra.mxu0 %v522
        %v586 = vpop.f32.mrf.mxu0
        %v587 = vadd.f32 %v474, %v586
        %588 = vmatmul.f32.gmra.mxu0 %v525
        %v589 = vpop.f32.mrf.mxu0
        %v590 = vadd.f32 %v477, %v589
        %591 = vmatmul.f32.gmra.mxu0 %v528
        %v592 = vpop.f32.mrf.mxu0
        %v593 = vadd.f32 %v480, %v592
        %594 = vmatmul.f32.gmra.mxu0 %v531
        %v595 = vpop.f32.mrf.mxu0
        %v596 = vadd.f32 %v483, %v595
        %597 = vmatmul.f32.gmra.mxu0 %v534
        %v598 = vpop.f32.mrf.mxu0
        %v599 = vadd.f32 %v486, %v598
        %600 = vmatmul.f32.gmra.mxu0 %v537
        %v601 = vpop.f32.mrf.mxu0
        %v602 = vadd.f32 %v489, %v601
        %603 = vmatmul.f32.gmra.mxu0 %v540
        %v604 = vpop.f32.mrf.mxu0
        %v605 = vadd.f32 %v492, %v604
        %606 = vmatmul.f32.gmra.mxu0 %v543
        %v607 = vpop.f32.mrf.mxu0
        %v608 = vadd.f32 %v495, %v607
        %609 = vmatmul.f32.gmra.mxu0 %v546
        %v610 = vpop.f32.mrf.mxu0
        %v611 = vadd.f32 %v498, %v610
        %612 = vmatmul.f32.gmra.mxu0 %v549
        %v613 = vpop.f32.mrf.mxu0
        %v614 = vadd.f32 %v501, %v613
        %615 = vmatmul.f32.gmra.mxu0 %v552
        %v616 = vpop.f32.mrf.mxu0
        %v617 = vadd.f32 %v504, %v616
        %618 = vdwg.mxu0
        %v619 = vld [vmem:[%s4] sm:$0x1]
        %v621 = vperm.slane %v619, 0
        %v623 = vadd.f32 %v572, %v621
        %v624 = vadd.f32 %v575, %v621
        %v625 = vadd.f32 %v578, %v621
        %v626 = vadd.f32 %v581, %v621
        %v627 = vadd.f32 %v584, %v621
        %v628 = vadd.f32 %v587, %v621
        %v629 = vadd.f32 %v590, %v621
        %v630 = vadd.f32 %v593, %v621
        %v631 = vadd.f32 %v596, %v621
        %v632 = vadd.f32 %v599, %v621
        %v633 = vadd.f32 %v602, %v621
        %v634 = vadd.f32 %v605, %v621
        %v635 = vadd.f32 %v608, %v621
        %v636 = vadd.f32 %v611, %v621
        %v637 = vadd.f32 %v614, %v621
        %v638 = vadd.f32 %v617, %v621
        %v639 = vmax.f32 %v623, 0.0
        %v640 = vmax.f32 %v624, 0.0
        %v641 = vmax.f32 %v625, 0.0
        %v642 = vmax.f32 %v626, 0.0
        %v643 = vmax.f32 %v627, 0.0
        %v644 = vmax.f32 %v628, 0.0
        %v645 = vmax.f32 %v629, 0.0
        %v646 = vmax.f32 %v630, 0.0
        %v647 = vmax.f32 %v631, 0.0
        %v648 = vmax.f32 %v632, 0.0
        %v649 = vmax.f32 %v633, 0.0
        %v650 = vmax.f32 %v634, 0.0
        %v651 = vmax.f32 %v635, 0.0
        %v652 = vmax.f32 %v636, 0.0
        %v653 = vmax.f32 %v637, 0.0
        %v654 = vmax.f32 %v638, 0.0
        %v655 = vld [vmem:[%s5] sm:$0xff]
        %v656 = vld [vmem:[%s5 + $0x8] sm:$0xff]
        %v657 = vld [vmem:[%s5 + $0x10] sm:$0xff]
        %v658 = vld [vmem:[%s5 + $0x18] sm:$0xff]
        %v659 = vld [vmem:[%s5 + $0x20] sm:$0xff]
        %v660 = vld [vmem:[%s5 + $0x28] sm:$0xff]
        %v661 = vld [vmem:[%s5 + $0x30] sm:$0xff]
        %v662 = vld [vmem:[%s5 + $0x38] sm:$0xff]
        %v663 = vld [vmem:[%s6] sm:$0x1]
        %v665 = vperm.slane %v663, 0
        %vm667 = vcmask 523264
        %v669 = vsel %vm667, %v639, 0
        %v672 = vsel %vm667, %v640, 0
        %v675 = vsel %vm667, %v641, 0
        %v678 = vsel %vm667, %v642, 0
        %v681 = vsel %vm667, %v643, 0
        %v684 = vsel %vm667, %v644, 0
        %v687 = vsel %vm667, %v645, 0
        %v690 = vsel %vm667, %v646, 0
        %v693 = vsel %vm667, %v647, 0
        %v696 = vsel %vm667, %v648, 0
        %v699 = vsel %vm667, %v649, 0
        %v702 = vsel %vm667, %v650, 0
        %v705 = vsel %vm667, %v651, 0
        %v708 = vsel %vm667, %v652, 0
        %v711 = vsel %vm667, %v653, 0
        %v714 = vsel %vm667, %v654, 0
        %716 = vmatpush.msra.mxu0 0.0
        %717 = vmatpush.msra.mxu0 0.0
        %718 = vmatpush.msra.mxu0 0.0
        %719 = vmatpush.msra.mxu0 0.0
        %720 = vmatpush.msra.mxu0 0.0
        %721 = vmatpush.msra.mxu0 0.0
        %722 = vmatpush.msra.mxu0 0.0
        %723 = vmatpush.msra.mxu0 0.0
        %724 = vmatpush.msra.mxu0 %v662
        %725 = vmatpush.msra.mxu0 %v661
        %726 = vmatpush.msra.mxu0 %v660
        %727 = vmatpush.msra.mxu0 %v659
        %728 = vmatpush.msra.mxu0 %v658
        %729 = vmatpush.msra.mxu0 %v657
        %730 = vmatpush.msra.mxu0 %v656
        %731 = vmatpush.msra.mxu0 %v655
        %732 = vmatmul.f32.gmra.mxu0 %v669
        %v733 = vpop.f32.mrf.mxu0
        %v734 = vadd.f32 %v665, %v733
        %735 = vmatmul.f32.gmra.mxu0 %v672
        %v736 = vpop.f32.mrf.mxu0
        %v737 = vadd.f32 %v665, %v736
        %738 = vmatmul.f32.gmra.mxu0 %v675
        %v739 = vpop.f32.mrf.mxu0
        %v740 = vadd.f32 %v665, %v739
        %741 = vmatmul.f32.gmra.mxu0 %v678
        %v742 = vpop.f32.mrf.mxu0
        %v743 = vadd.f32 %v665, %v742
        %744 = vmatmul.f32.gmra.mxu0 %v681
        %v745 = vpop.f32.mrf.mxu0
        %v746 = vadd.f32 %v665, %v745
        %747 = vmatmul.f32.gmra.mxu0 %v684
        %v748 = vpop.f32.mrf.mxu0
        %v749 = vadd.f32 %v665, %v748
        %750 = vmatmul.f32.gmra.mxu0 %v687
        %v751 = vpop.f32.mrf.mxu0
        %v752 = vadd.f32 %v665, %v751
        %753 = vmatmul.f32.gmra.mxu0 %v690
        %v754 = vpop.f32.mrf.mxu0
        %v755 = vadd.f32 %v665, %v754
        %756 = vmatmul.f32.gmra.mxu0 %v693
        %v757 = vpop.f32.mrf.mxu0
        %v758 = vadd.f32 %v665, %v757
        %759 = vmatmul.f32.gmra.mxu0 %v696
        %v760 = vpop.f32.mrf.mxu0
        %v761 = vadd.f32 %v665, %v760
        %762 = vmatmul.f32.gmra.mxu0 %v699
        %v763 = vpop.f32.mrf.mxu0
        %v764 = vadd.f32 %v665, %v763
        %765 = vmatmul.f32.gmra.mxu0 %v702
        %v766 = vpop.f32.mrf.mxu0
        %v767 = vadd.f32 %v665, %v766
        %768 = vmatmul.f32.gmra.mxu0 %v705
        %v769 = vpop.f32.mrf.mxu0
        %v770 = vadd.f32 %v665, %v769
        %771 = vmatmul.f32.gmra.mxu0 %v708
        %v772 = vpop.f32.mrf.mxu0
        %v773 = vadd.f32 %v665, %v772
        %774 = vmatmul.f32.gmra.mxu0 %v711
        %v775 = vpop.f32.mrf.mxu0
        %v776 = vadd.f32 %v665, %v775
        %777 = vmatmul.f32.gmra.mxu0 %v714
        %v778 = vpop.f32.mrf.mxu0
        %v779 = vadd.f32 %v665, %v778
        %780 = vdwg.mxu0
        %v781 = vmul.f32 %v734, 0.01
        %v782 = vmul.f32 %v737, 0.01
        %v783 = vmul.f32 %v740, 0.01
        %v784 = vmul.f32 %v743, 0.01
        %v785 = vmul.f32 %v746, 0.01
        %v786 = vmul.f32 %v749, 0.01
        %v787 = vmul.f32 %v752, 0.01
        %v788 = vmul.f32 %v755, 0.01
        %v789 = vmul.f32 %v758, 0.01
        %v790 = vmul.f32 %v761, 0.01
        %v791 = vmul.f32 %v764, 0.01
        %v792 = vmul.f32 %v767, 0.01
        %v793 = vmul.f32 %v770, 0.01
        %v794 = vmul.f32 %v773, 0.01
        %v795 = vmul.f32 %v776, 0.01
        %v796 = vmul.f32 %v779, 0.01
        %v797 = vmax.f32 %v734, %v781
        %v798 = vmax.f32 %v737, %v782
        %v799 = vmax.f32 %v740, %v783
        %v800 = vmax.f32 %v743, %v784
        %v801 = vmax.f32 %v746, %v785
        %v802 = vmax.f32 %v749, %v786
        %v803 = vmax.f32 %v752, %v787
        %v804 = vmax.f32 %v755, %v788
        %v805 = vmax.f32 %v758, %v789
        %v806 = vmax.f32 %v761, %v790
        %v807 = vmax.f32 %v764, %v791
        %v808 = vmax.f32 %v767, %v792
        %v809 = vmax.f32 %v770, %v793
        %v810 = vmax.f32 %v773, %v794
        %v811 = vmax.f32 %v776, %v795
        %v812 = vmax.f32 %v779, %v796
        %v813 = vld [vmem:[%s7] sm:$0xff]
        %v814 = vld [vmem:[%s7 + $0x8] sm:$0xff]
        %v815 = vld [vmem:[%s7 + $0x10] sm:$0xff]
        %v816 = vld [vmem:[%s7 + $0x18] sm:$0xff]
        %v817 = vld [vmem:[%s8] sm:$0x1]
        %v819 = vperm.slane %v817, 0
        %vm821 = vcmask 261120
        %v823 = vsel %vm821, %v797, 0
        %v826 = vsel %vm821, %v798, 0
        %v829 = vsel %vm821, %v799, 0
        %v832 = vsel %vm821, %v800, 0
        %v835 = vsel %vm821, %v801, 0
        %v838 = vsel %vm821, %v802, 0
        %v841 = vsel %vm821, %v803, 0
        %v844 = vsel %vm821, %v804, 0
        %v847 = vsel %vm821, %v805, 0
        %v850 = vsel %vm821, %v806, 0
        %v853 = vsel %vm821, %v807, 0
        %v856 = vsel %vm821, %v808, 0
        %v859 = vsel %vm821, %v809, 0
        %v862 = vsel %vm821, %v810, 0
        %v865 = vsel %vm821, %v811, 0
        %v868 = vsel %vm821, %v812, 0
        %870 = vmatpush.msra.mxu0 0.0
        %871 = vmatpush.msra.mxu0 0.0
        %872 = vmatpush.msra.mxu0 0.0
        %873 = vmatpush.msra.mxu0 0.0
        %874 = vmatpush.msra.mxu0 0.0
        %875 = vmatpush.msra.mxu0 0.0
        %876 = vmatpush.msra.mxu0 0.0
        %877 = vmatpush.msra.mxu0 0.0
        %878 = vmatpush.msra.mxu0 0.0
        %879 = vmatpush.msra.mxu0 0.0
        %880 = vmatpush.msra.mxu0 0.0
        %881 = vmatpush.msra.mxu0 0.0
        %882 = vmatpush.msra.mxu0 %v816
        %883 = vmatpush.msra.mxu0 %v815
        %884 = vmatpush.msra.mxu0 %v814
        %885 = vmatpush.msra.mxu0 %v813
        %886 = vmatmul.f32.gmra.mxu0 %v823
        %v887 = vpop.f32.mrf.mxu0
        %v888 = vadd.f32 %v819, %v887
        %889 = vmatmul.f32.gmra.mxu0 %v826
        %v890 = vpop.f32.mrf.mxu0
        %v891 = vadd.f32 %v819, %v890
        %892 = vmatmul.f32.gmra.mxu0 %v829
        %v893 = vpop.f32.mrf.mxu0
        %v894 = vadd.f32 %v819, %v893
        %895 = vmatmul.f32.gmra.mxu0 %v832
        %v896 = vpop.f32.mrf.mxu0
        %v897 = vadd.f32 %v819, %v896
        %898 = vmatmul.f32.gmra.mxu0 %v835
        %v899 = vpop.f32.mrf.mxu0
        %v900 = vadd.f32 %v819, %v899
        %901 = vmatmul.f32.gmra.mxu0 %v838
        %v902 = vpop.f32.mrf.mxu0
        %v903 = vadd.f32 %v819, %v902
        %904 = vmatmul.f32.gmra.mxu0 %v841
        %v905 = vpop.f32.mrf.mxu0
        %v906 = vadd.f32 %v819, %v905
        %907 = vmatmul.f32.gmra.mxu0 %v844
        %v908 = vpop.f32.mrf.mxu0
        %v909 = vadd.f32 %v819, %v908
        %910 = vmatmul.f32.gmra.mxu0 %v847
        %v911 = vpop.f32.mrf.mxu0
        %v912 = vadd.f32 %v819, %v911
        %913 = vmatmul.f32.gmra.mxu0 %v850
        %v914 = vpop.f32.mrf.mxu0
        %v915 = vadd.f32 %v819, %v914
        %916 = vmatmul.f32.gmra.mxu0 %v853
        %v917 = vpop.f32.mrf.mxu0
        %v918 = vadd.f32 %v819, %v917
        %919 = vmatmul.f32.gmra.mxu0 %v856
        %v920 = vpop.f32.mrf.mxu0
        %v921 = vadd.f32 %v819, %v920
        %922 = vmatmul.f32.gmra.mxu0 %v859
        %v923 = vpop.f32.mrf.mxu0
        %v924 = vadd.f32 %v819, %v923
        %925 = vmatmul.f32.gmra.mxu0 %v862
        %v926 = vpop.f32.mrf.mxu0
        %v927 = vadd.f32 %v819, %v926
        %928 = vmatmul.f32.gmra.mxu0 %v865
        %v929 = vpop.f32.mrf.mxu0
        %v930 = vadd.f32 %v819, %v929
        %931 = vmatmul.f32.gmra.mxu0 %v868
        %v932 = vpop.f32.mrf.mxu0
        %v933 = vadd.f32 %v819, %v932
        %934 = vdwg.mxu0
        %935 = vst [vmem:[%s342] sm:$0xff] %v888
        %936 = vst [vmem:[%s342 + $0x8] sm:$0xff] %v891
        %937 = vst [vmem:[%s342 + $0x10] sm:$0xff] %v894
        %938 = vst [vmem:[%s342 + $0x18] sm:$0xff] %v897
        %939 = vst [vmem:[%s342 + $0x20] sm:$0xff] %v900
        %940 = vst [vmem:[%s342 + $0x28] sm:$0xff] %v903
        %941 = vst [vmem:[%s342 + $0x30] sm:$0xff] %v906
        %942 = vst [vmem:[%s342 + $0x38] sm:$0xff] %v909
        %943 = vst [vmem:[%s342 + $0x40] sm:$0xff] %v912
        %944 = vst [vmem:[%s342 + $0x48] sm:$0xff] %v915
        %945 = vst [vmem:[%s342 + $0x50] sm:$0xff] %v918
        %946 = vst [vmem:[%s342 + $0x58] sm:$0xff] %v921
        %947 = vst [vmem:[%s342 + $0x60] sm:$0xff] %v924
        %948 = vst [vmem:[%s342 + $0x68] sm:$0xff] %v927
        %949 = vst [vmem:[%s342 + $0x70] sm:$0xff] %v930
        %950 = vst [vmem:[%s342 + $0x78] sm:$0xff] %v933
        %s951 = sand.u32 %s230, 1
        %s952 = scalar_lea.sflag [#allocation3], %s951
        %s953 = sand.u32 %s230, 1
        %s954 = smul.addr %s953, 128
        %s955 = scalar_lea.vmem [#allocation2], %s954
        // Predicated region
        $region57: #{tpu_custom_call.1} parent=55 // pred_check
          %p956 = pneg %p240
        $region58: #{tpu_custom_call.1} parent=55 // pred_check_branch
          %958 = sbr.rel (%p956) target = $region60
        $region59: #{tpu_custom_call.1} parent=55 // pred_region
          %s959 = smul.u32 16, %s23
          %961 = vsyncadd %s952, 0
          %s962 = smul.addr %s959, 8
          %s963 = scalar_lea.hbm %s9, %s962
          %s964 = sshll.u32 %s955, 4
          %s965 = int_to_ptr.vmem [resolvable:$true] %s964
          %s966 = sshll.u32 %s963, 4
          %s967 = int_to_ptr.hbm [resolvable:$true] %s966
          %972 = dma.vmem_to_hbm [thread:$0]  %s965, 2048, %s967, %s952, 128, 128, 8
        $region60: #{tpu_custom_call.1} parent=55 // pred_fallthru
          _
      $region56: #{tpu_custom_call.1} parent=5 // pred_fallthru
        _
      %p973 = scmp.le.s32.totalorder 2, %s18
      // Predicated region
      $region61: #{tpu_custom_call.1} parent=5 // pred_check
        %p974 = pneg %p973
      $region62: #{tpu_custom_call.1} parent=5 // pred_check_branch
        %976 = sbr.rel (%p974) target = $region64
      $region63: #{tpu_custom_call.1} parent=5 // pred_region
        %s977 = ssub.s32 %s18, 2
        // Predicated region
        $region65: #{tpu_custom_call.1} parent=63 // pred_check
          %p978 = pneg %p246
        $region66: #{tpu_custom_call.1} parent=63 // pred_check_branch
          %980 = sbr.rel (%p978) target = $region68
        $region67: #{tpu_custom_call.1} parent=63 // pred_region
          %s981 = sand.u32 %s231, 1
          %s982 = scalar_lea.sflag [#allocation3], %s981
          %s983 = sand.u32 %s231, 1
          %s984 = smul.addr %s983, 128
          %s985 = scalar_lea.vmem [#allocation2], %s984
          %987 = dma.done %s982, 2048
        $region68: #{tpu_custom_call.1} parent=63 // pred_fallthru
          _
      $region64: #{tpu_custom_call.1} parent=5 // pred_fallthru
        _
    $region6: #{tpu_custom_call.1} parent=1 // loop_footer
      %s22 = sadd.s32 1, %s18
    $region7: #{tpu_custom_call.1} parent=1 // loop_footer_branch
      %17 = sbr.rel target = $region3
    $region8: #{tpu_custom_call.1} parent=1 // loop_exit
      _
    %988 = vsyncpa [#allocation3], 1
    %s989 = scalar_lea.sflag [#allocation3], 1
    %990 = vsyncpa %s989, 1

</llo_original>
